<compile_context>
chip_gen: v7x
topology: tpu7x:2x2x1
jax: 0.10.0
libtpu: 0.0.40
codegen_flags: <defaults>
</compile_context>

<pallas_src>
import functools

import jax
import jax.numpy as jnp
from jax.experimental import pallas as pl
from jax.experimental.pallas import tpu as pltpu

_LANE = 128
_SUBLANE = 8
_NEG_INF = -1e30      # finite "-inf": keeps 0 * (-1e30) == 0 in the CE term
_PAD_TOKEN = 1


def _round_up(x, m):
    return ((x + m - 1) // m) * m


def head_kernel(ids_smem, ids_ref, labels_ref, emb_hbm, w_ref, b_ref,
                prob_ref, loss_ref, x_buf, sem, *, b_real):
    """Fused last-token classifier head.

    ids_smem   : [Bp]     int32  last-token ids (SMEM, for DMA addressing)
    ids_ref    : [Bp, 1]  int32  last-token ids (VMEM, for the pad mask)
    labels_ref : [Bp, 1]  int32  class labels                         (VMEM)
    emb_hbm    : [V, H]   f32    embedding table (encoder stub)       (HBM / ANY)
    w_ref      : [H, Cp]  bf16   classifier weight, lane-padded       (VMEM)
    b_ref      : [1, Cp]  f32    classifier bias (-1e30 on padding)   (VMEM)
    prob_ref   : [Bp, Cp] f32    softmax probabilities                (VMEM)
    loss_ref   : [1]      f32    mean cross-entropy loss              (SMEM)
    x_buf      : [Bp, H]  f32    gathered last-token embeddings       (VMEM scratch)
    sem        : [Bp]            DMA semaphores (one per gathered row)
    """
    B_pad, Cp = prob_ref.shape

    # --- O(B*H) row gather straight from HBM (encoder stub) -----------------
    copies = [
        pltpu.make_async_copy(
            emb_hbm.at[pl.ds(ids_smem[r], 1), :],   # [1, H] source row in HBM
            x_buf.at[pl.ds(r, 1), :],               # [1, H] destination row
            sem.at[r])
        for r in range(B_pad)
    ]
    for c in copies:
        c.start()
    for c in copies:
        c.wait()

    # Encoder stub masking: zero the hidden state when the last token is pad.
    mask = (ids_ref[...] != _PAD_TOKEN).astype(jnp.float32)        # [Bp, 1]
    x = x_buf[...] * mask                                          # [Bp, H] f32

    # Classifier: bf16 operands on the MXU, f32 accumulation.
    # Padded classes carry bias = -1e30 -> exp() underflows to 0.
    logits = jnp.dot(x.astype(jnp.bfloat16), w_ref[...],
                     preferred_element_type=jnp.float32) + b_ref[...]

    # Numerically stable softmax over the lane-dense (padded) class dim.
    m = jnp.max(logits, axis=-1, keepdims=True)
    e = jnp.exp(logits - m)
    s = jnp.sum(e, axis=-1, keepdims=True)
    prob_ref[...] = e / s                       # exact divide; rows sum to 1

    # Mean cross-entropy over the *real* batch rows only.
    log_probs = (logits - m) - jnp.log(s)                           # [Bp, Cp]
    onehot = (jax.lax.broadcasted_iota(jnp.int32, (B_pad, Cp), 1)
              == labels_ref[...]).astype(jnp.float32)
    valid = (jax.lax.broadcasted_iota(jnp.int32, (B_pad, 1), 0)
             < b_real).astype(jnp.float32)                          # [Bp, 1]
    per_ex = -jnp.sum(onehot * log_probs, axis=-1, keepdims=True) * valid
    loss_ref[0] = jnp.sum(per_ex) * (1.0 / b_real)


def prepare_classifier_params(w, b):
    """Setup-time (call once): lane-pad the classifier to 128 classes.

    Zero weight columns and -1e30 bias on the padding -> padded classes get
    probability 0 and contribute 0 to the CE term.  Weight is stored bf16.
    """
    H, C = w.shape
    Cp = _round_up(max(C, _LANE), _LANE)
    w_pad = jnp.zeros((H, Cp), jnp.bfloat16).at[:, :C].set(w.astype(jnp.bfloat16))
    b_pad = jnp.full((1, Cp), _NEG_INF, jnp.float32).at[0, :C].set(b.astype(jnp.float32))
    return w_pad, b_pad


@functools.partial(jax.jit, static_argnames=("num_classes",))
def classifier_head(last_ids, labels, embedding, w_pad, b_pad, *, num_classes):
    """Run the fused head kernel (gridless; embedding stays in HBM)."""
    B = last_ids.shape[0]
    H = embedding.shape[1]
    Cp = w_pad.shape[1]
    B_pad = _round_up(max(B, _SUBLANE), _SUBLANE)

    # Sublane-pad the batch: padded rows carry the pad token (-> zero hidden
    # state) and label 0; the kernel excludes them from the loss.
    ids_p = jnp.full((B_pad,), _PAD_TOKEN, jnp.int32).at[:B].set(
        last_ids.astype(jnp.int32))
    lab_p = jnp.zeros((B_pad,), jnp.int32).at[:B].set(labels.astype(jnp.int32))

    smem = pl.BlockSpec(memory_space=pltpu.MemorySpace.SMEM)
    vmem = pl.BlockSpec(memory_space=pltpu.MemorySpace.VMEM)
    hbm = pl.BlockSpec(memory_space=pl.ANY)

    prob_pad, loss = pl.pallas_call(
        functools.partial(head_kernel, b_real=B),
        out_shape=(
            jax.ShapeDtypeStruct((B_pad, Cp), jnp.float32),   # lane-dense prob
            jax.ShapeDtypeStruct((1,), jnp.float32),          # scalar loss (SMEM)
        ),
        in_specs=[smem, vmem, vmem, hbm, vmem, vmem],
        out_specs=(vmem, smem),
        scratch_shapes=[
            pltpu.VMEM((B_pad, H), jnp.float32),      # gathered embeddings
            pltpu.SemaphoreType.DMA((B_pad,)),        # one sem per row DMA
        ],
        compiler_params=pltpu.CompilerParams(
            vmem_limit_bytes=32 * 1024 * 1024,        # explicit; kernel uses O(B*H)
        ),
    )(
        ids_p,                        # SMEM: DMA addressing
        ids_p.reshape(B_pad, 1),      # VMEM: pad mask
        lab_p.reshape(B_pad, 1),
        embedding.astype(jnp.float32),   # stays in HBM (pl.ANY)
        w_pad,
        b_pad,
    )
    # Lane-narrow slice is done once here in the wrapper to match the module's
    # [B, 2] API; keep the lane-dense slab if the consumer allows it.
    return prob_pad[:B, :num_classes], loss[0]


def model_forward(input_ids, labels, embedding, w_pad, b_pad, num_classes=2):
    """Mirror of Model.forward (eval mode: dropout is identity)."""
    # TODO(synk): the real encoder is an external HuggingFace transformer passed
    # to __init__ (wrapped in torch checkpointing); it is stubbed here by a
    # deterministic embedding lookup masked at pad id == 1.  Only the last
    # position feeds the classifier, so only input_ids[:, -1] is gathered —
    # the [B, S, H] hidden-state tensor is never materialized.
    last_ids = input_ids[:, -1]

    if labels is None:
        dummy = jnp.zeros((input_ids.shape[0],), jnp.int32)
        prob, _ = classifier_head(last_ids, dummy, embedding, w_pad, b_pad,
                                  num_classes=num_classes)
        return prob

    prob, loss = classifier_head(last_ids, labels, embedding, w_pad, b_pad,
                                 num_classes=num_classes)
    return loss, prob


if __name__ == "__main__":
    # Small shapes consistent with the module's forward.
    B, S, H, V, C = 2, 8, 32, 50, 2

    key = jax.random.PRNGKey(0)
    k_ids, k_lab, k_emb, k_w, k_b = jax.random.split(key, 5)

    input_ids = jax.random.randint(k_ids, (B, S), minval=0, maxval=V, dtype=jnp.int32)
    labels = jax.random.randint(k_lab, (B,), minval=0, maxval=C, dtype=jnp.int32)

    # Deterministic synthetic parameters (no checkpoint loading).
    embedding = jax.random.normal(k_emb, (V, H), dtype=jnp.float32) * 0.02
    w = jax.random.normal(k_w, (H, C), dtype=jnp.float32) * 0.02   # [H, C] = PyTorch W.T
    b = jax.random.normal(k_b, (C,), dtype=jnp.float32) * 0.02

    # Setup-time padding (done once, outside the hot path).
    w_pad, b_pad = prepare_classifier_params(w, b)

    loss, prob = model_forward(input_ids, labels, embedding, w_pad, b_pad, num_classes=C)
    jax.block_until_ready((loss, prob))

    # labels=None path (returns prob only, like the PyTorch module).
    prob_only = model_forward(input_ids, None, embedding, w_pad, b_pad, num_classes=C)
    jax.block_until_ready(prob_only)

    # Pure-JAX (f32) reference of the same stub-encoder forward.
    mask = (input_ids != 1)
    hs = embedding[input_ids] * mask[..., None].astype(jnp.float32)
    last = hs[:, -1, :]
    logits_ref = last @ w + b
    prob_ref = jax.nn.softmax(logits_ref, axis=-1)
    loss_ref = -jnp.mean(
        jnp.take_along_axis(jax.nn.log_softmax(logits_ref, axis=-1),
                            labels[:, None], axis=-1)
    )
    # Kernel uses bf16 matmul operands (f32 accumulation) -> tiny deviation.
    assert jnp.allclose(prob, prob_ref, atol=1e-3), (prob, prob_ref)
    assert jnp.allclose(prob_only, prob_ref, atol=1e-3), (prob_only, prob_ref)
    assert jnp.allclose(loss, loss_ref, atol=1e-3), (loss, loss_ref)
    # Rows of prob sum to exactly 1 (exact divide, no approx reciprocal).
    assert jnp.allclose(prob.sum(-1), 1.0, atol=1e-6)

    print("KERNEL_OK")
</pallas_src>

<mosaic_0001>
module attributes {stable_mosaic.version = 11 : i64} {
  func.func @head_kernel(%arg0: memref<8xi32, #tpu.memory_space<smem>>, %arg1: memref<8x1xi32, #tpu.memory_space<vmem>>, %arg2: memref<8x1xi32, #tpu.memory_space<vmem>>, %arg3: memref<50x32xf32, #tpu.memory_space<any>>, %arg4: memref<32x128xbf16, #tpu.memory_space<vmem>>, %arg5: memref<1x128xf32, #tpu.memory_space<vmem>>, %arg6: memref<8x128xf32, #tpu.memory_space<vmem>>, %arg7: memref<1xf32, #tpu.memory_space<smem>>, %arg8: memref<8x32xf32, #tpu.memory_space<vmem>>, %arg9: memref<8x!tpu.dma_semaphore, #tpu.memory_space<semaphore_mem>>) attributes {dimension_semantics = [], scalar_prefetch = 0 : i64, scratch_operands = 2 : i64, tpu.core_type = #tpu.core_type<tc>} {
    %c0 = arith.constant 0 : index
    %0 = memref.load %arg0[%c0] : memref<8xi32, #tpu.memory_space<smem>>
    %c1 = arith.constant 1 : index
    %1 = memref.load %arg0[%c1] : memref<8xi32, #tpu.memory_space<smem>>
    %c2 = arith.constant 2 : index
    %2 = memref.load %arg0[%c2] : memref<8xi32, #tpu.memory_space<smem>>
    %c3 = arith.constant 3 : index
    %3 = memref.load %arg0[%c3] : memref<8xi32, #tpu.memory_space<smem>>
    %c4 = arith.constant 4 : index
    %4 = memref.load %arg0[%c4] : memref<8xi32, #tpu.memory_space<smem>>
    %c5 = arith.constant 5 : index
    %5 = memref.load %arg0[%c5] : memref<8xi32, #tpu.memory_space<smem>>
    %c6 = arith.constant 6 : index
    %6 = memref.load %arg0[%c6] : memref<8xi32, #tpu.memory_space<smem>>
    %c7 = arith.constant 7 : index
    %7 = memref.load %arg0[%c7] : memref<8xi32, #tpu.memory_space<smem>>
    %c0_i32 = arith.constant 0 : i32
    %c0_i32_0 = arith.constant 0 : i32
    %8 = tpu.memref_slice %arg3[%0, %c0_i32_0] : memref<50x32xf32, #tpu.memory_space<any>> -> memref<1x32xf32, #tpu.memory_space<any>>
    %c0_i32_1 = arith.constant 0 : i32
    %c0_i32_2 = arith.constant 0 : i32
    %9 = tpu.memref_slice %arg8[%c0_i32_1, %c0_i32_2] : memref<8x32xf32, #tpu.memory_space<vmem>> -> memref<1x32xf32, #tpu.memory_space<vmem>>
    %10 = tpu.memref_slice %arg9[%c0_i32] : memref<8x!tpu.dma_semaphore, #tpu.memory_space<semaphore_mem>> -> memref<1x!tpu.dma_semaphore, #tpu.memory_space<semaphore_mem>>
    %11 = tpu.memref_squeeze %10 : memref<1x!tpu.dma_semaphore, #tpu.memory_space<semaphore_mem>> -> memref<!tpu.dma_semaphore, #tpu.memory_space<semaphore_mem>>
    tpu.enqueue_dma source(%8 : memref<1x32xf32, #tpu.memory_space<any>>) target(%9 : memref<1x32xf32, #tpu.memory_space<vmem>>) target_semaphore(%11 : memref<!tpu.dma_semaphore, #tpu.memory_space<semaphore_mem>>)
    %c1_i32 = arith.constant 1 : i32
    %c0_i32_3 = arith.constant 0 : i32
    %12 = tpu.memref_slice %arg3[%1, %c0_i32_3] : memref<50x32xf32, #tpu.memory_space<any>> -> memref<1x32xf32, #tpu.memory_space<any>>
    %c1_i32_4 = arith.constant 1 : i32
    %c0_i32_5 = arith.constant 0 : i32
    %13 = tpu.memref_slice %arg8[%c1_i32_4, %c0_i32_5] : memref<8x32xf32, #tpu.memory_space<vmem>> -> memref<1x32xf32, #tpu.memory_space<vmem>>
    %14 = tpu.memref_slice %arg9[%c1_i32] : memref<8x!tpu.dma_semaphore, #tpu.memory_space<semaphore_mem>> -> memref<1x!tpu.dma_semaphore, #tpu.memory_space<semaphore_mem>>
    %15 = tpu.memref_squeeze %14 : memref<1x!tpu.dma_semaphore, #tpu.memory_space<semaphore_mem>> -> memref<!tpu.dma_semaphore, #tpu.memory_space<semaphore_mem>>
    tpu.enqueue_dma source(%12 : memref<1x32xf32, #tpu.memory_space<any>>) target(%13 : memref<1x32xf32, #tpu.memory_space<vmem>>) target_semaphore(%15 : memref<!tpu.dma_semaphore, #tpu.memory_space<semaphore_mem>>)
    %c2_i32 = arith.constant 2 : i32
    %c0_i32_6 = arith.constant 0 : i32
    %16 = tpu.memref_slice %arg3[%2, %c0_i32_6] : memref<50x32xf32, #tpu.memory_space<any>> -> memref<1x32xf32, #tpu.memory_space<any>>
    %c2_i32_7 = arith.constant 2 : i32
    %c0_i32_8 = arith.constant 0 : i32
    %17 = tpu.memref_slice %arg8[%c2_i32_7, %c0_i32_8] : memref<8x32xf32, #tpu.memory_space<vmem>> -> memref<1x32xf32, #tpu.memory_space<vmem>>
    %18 = tpu.memref_slice %arg9[%c2_i32] : memref<8x!tpu.dma_semaphore, #tpu.memory_space<semaphore_mem>> -> memref<1x!tpu.dma_semaphore, #tpu.memory_space<semaphore_mem>>
    %19 = tpu.memref_squeeze %18 : memref<1x!tpu.dma_semaphore, #tpu.memory_space<semaphore_mem>> -> memref<!tpu.dma_semaphore, #tpu.memory_space<semaphore_mem>>
    tpu.enqueue_dma source(%16 : memref<1x32xf32, #tpu.memory_space<any>>) target(%17 : memref<1x32xf32, #tpu.memory_space<vmem>>) target_semaphore(%19 : memref<!tpu.dma_semaphore, #tpu.memory_space<semaphore_mem>>)
    %c3_i32 = arith.constant 3 : i32
    %c0_i32_9 = arith.constant 0 : i32
    %20 = tpu.memref_slice %arg3[%3, %c0_i32_9] : memref<50x32xf32, #tpu.memory_space<any>> -> memref<1x32xf32, #tpu.memory_space<any>>
    %c3_i32_10 = arith.constant 3 : i32
    %c0_i32_11 = arith.constant 0 : i32
    %21 = tpu.memref_slice %arg8[%c3_i32_10, %c0_i32_11] : memref<8x32xf32, #tpu.memory_space<vmem>> -> memref<1x32xf32, #tpu.memory_space<vmem>>
    %22 = tpu.memref_slice %arg9[%c3_i32] : memref<8x!tpu.dma_semaphore, #tpu.memory_space<semaphore_mem>> -> memref<1x!tpu.dma_semaphore, #tpu.memory_space<semaphore_mem>>
    %23 = tpu.memref_squeeze %22 : memref<1x!tpu.dma_semaphore, #tpu.memory_space<semaphore_mem>> -> memref<!tpu.dma_semaphore, #tpu.memory_space<semaphore_mem>>
    tpu.enqueue_dma source(%20 : memref<1x32xf32, #tpu.memory_space<any>>) target(%21 : memref<1x32xf32, #tpu.memory_space<vmem>>) target_semaphore(%23 : memref<!tpu.dma_semaphore, #tpu.memory_space<semaphore_mem>>)
    %c4_i32 = arith.constant 4 : i32
    %c0_i32_12 = arith.constant 0 : i32
    %24 = tpu.memref_slice %arg3[%4, %c0_i32_12] : memref<50x32xf32, #tpu.memory_space<any>> -> memref<1x32xf32, #tpu.memory_space<any>>
    %c4_i32_13 = arith.constant 4 : i32
    %c0_i32_14 = arith.constant 0 : i32
    %25 = tpu.memref_slice %arg8[%c4_i32_13, %c0_i32_14] : memref<8x32xf32, #tpu.memory_space<vmem>> -> memref<1x32xf32, #tpu.memory_space<vmem>>
    %26 = tpu.memref_slice %arg9[%c4_i32] : memref<8x!tpu.dma_semaphore, #tpu.memory_space<semaphore_mem>> -> memref<1x!tpu.dma_semaphore, #tpu.memory_space<semaphore_mem>>
    %27 = tpu.memref_squeeze %26 : memref<1x!tpu.dma_semaphore, #tpu.memory_space<semaphore_mem>> -> memref<!tpu.dma_semaphore, #tpu.memory_space<semaphore_mem>>
    tpu.enqueue_dma source(%24 : memref<1x32xf32, #tpu.memory_space<any>>) target(%25 : memref<1x32xf32, #tpu.memory_space<vmem>>) target_semaphore(%27 : memref<!tpu.dma_semaphore, #tpu.memory_space<semaphore_mem>>)
    %c5_i32 = arith.constant 5 : i32
    %c0_i32_15 = arith.constant 0 : i32
    %28 = tpu.memref_slice %arg3[%5, %c0_i32_15] : memref<50x32xf32, #tpu.memory_space<any>> -> memref<1x32xf32, #tpu.memory_space<any>>
    %c5_i32_16 = arith.constant 5 : i32
    %c0_i32_17 = arith.constant 0 : i32
    %29 = tpu.memref_slice %arg8[%c5_i32_16, %c0_i32_17] : memref<8x32xf32, #tpu.memory_space<vmem>> -> memref<1x32xf32, #tpu.memory_space<vmem>>
    %30 = tpu.memref_slice %arg9[%c5_i32] : memref<8x!tpu.dma_semaphore, #tpu.memory_space<semaphore_mem>> -> memref<1x!tpu.dma_semaphore, #tpu.memory_space<semaphore_mem>>
    %31 = tpu.memref_squeeze %30 : memref<1x!tpu.dma_semaphore, #tpu.memory_space<semaphore_mem>> -> memref<!tpu.dma_semaphore, #tpu.memory_space<semaphore_mem>>
    tpu.enqueue_dma source(%28 : memref<1x32xf32, #tpu.memory_space<any>>) target(%29 : memref<1x32xf32, #tpu.memory_space<vmem>>) target_semaphore(%31 : memref<!tpu.dma_semaphore, #tpu.memory_space<semaphore_mem>>)
    %c6_i32 = arith.constant 6 : i32
    %c0_i32_18 = arith.constant 0 : i32
    %32 = tpu.memref_slice %arg3[%6, %c0_i32_18] : memref<50x32xf32, #tpu.memory_space<any>> -> memref<1x32xf32, #tpu.memory_space<any>>
    %c6_i32_19 = arith.constant 6 : i32
    %c0_i32_20 = arith.constant 0 : i32
    %33 = tpu.memref_slice %arg8[%c6_i32_19, %c0_i32_20] : memref<8x32xf32, #tpu.memory_space<vmem>> -> memref<1x32xf32, #tpu.memory_space<vmem>>
    %34 = tpu.memref_slice %arg9[%c6_i32] : memref<8x!tpu.dma_semaphore, #tpu.memory_space<semaphore_mem>> -> memref<1x!tpu.dma_semaphore, #tpu.memory_space<semaphore_mem>>
    %35 = tpu.memref_squeeze %34 : memref<1x!tpu.dma_semaphore, #tpu.memory_space<semaphore_mem>> -> memref<!tpu.dma_semaphore, #tpu.memory_space<semaphore_mem>>
    tpu.enqueue_dma source(%32 : memref<1x32xf32, #tpu.memory_space<any>>) target(%33 : memref<1x32xf32, #tpu.memory_space<vmem>>) target_semaphore(%35 : memref<!tpu.dma_semaphore, #tpu.memory_space<semaphore_mem>>)
    %c7_i32 = arith.constant 7 : i32
    %c0_i32_21 = arith.constant 0 : i32
    %36 = tpu.memref_slice %arg3[%7, %c0_i32_21] : memref<50x32xf32, #tpu.memory_space<any>> -> memref<1x32xf32, #tpu.memory_space<any>>
    %c7_i32_22 = arith.constant 7 : i32
    %c0_i32_23 = arith.constant 0 : i32
    %37 = tpu.memref_slice %arg8[%c7_i32_22, %c0_i32_23] : memref<8x32xf32, #tpu.memory_space<vmem>> -> memref<1x32xf32, #tpu.memory_space<vmem>>
    %38 = tpu.memref_slice %arg9[%c7_i32] : memref<8x!tpu.dma_semaphore, #tpu.memory_space<semaphore_mem>> -> memref<1x!tpu.dma_semaphore, #tpu.memory_space<semaphore_mem>>
    %39 = tpu.memref_squeeze %38 : memref<1x!tpu.dma_semaphore, #tpu.memory_space<semaphore_mem>> -> memref<!tpu.dma_semaphore, #tpu.memory_space<semaphore_mem>>
    tpu.enqueue_dma source(%36 : memref<1x32xf32, #tpu.memory_space<any>>) target(%37 : memref<1x32xf32, #tpu.memory_space<vmem>>) target_semaphore(%39 : memref<!tpu.dma_semaphore, #tpu.memory_space<semaphore_mem>>)
    %c0_i32_24 = arith.constant 0 : i32
    %c0_i32_25 = arith.constant 0 : i32
    %40 = tpu.memref_slice %arg3[%0, %c0_i32_25] : memref<50x32xf32, #tpu.memory_space<any>> -> memref<1x32xf32, #tpu.memory_space<any>>
    %c0_i32_26 = arith.constant 0 : i32
    %c0_i32_27 = arith.constant 0 : i32
    %41 = tpu.memref_slice %arg8[%c0_i32_26, %c0_i32_27] : memref<8x32xf32, #tpu.memory_space<vmem>> -> memref<1x32xf32, #tpu.memory_space<vmem>>
    %42 = tpu.memref_slice %arg9[%c0_i32_24] : memref<8x!tpu.dma_semaphore, #tpu.memory_space<semaphore_mem>> -> memref<1x!tpu.dma_semaphore, #tpu.memory_space<semaphore_mem>>
    %43 = tpu.memref_squeeze %42 : memref<1x!tpu.dma_semaphore, #tpu.memory_space<semaphore_mem>> -> memref<!tpu.dma_semaphore, #tpu.memory_space<semaphore_mem>>
    tpu.wait_dma2 semaphore(%43 : memref<!tpu.dma_semaphore, #tpu.memory_space<semaphore_mem>>) src(%40 : memref<1x32xf32, #tpu.memory_space<any>>) dst(%41 : memref<1x32xf32, #tpu.memory_space<vmem>>)
    %c1_i32_28 = arith.constant 1 : i32
    %c0_i32_29 = arith.constant 0 : i32
    %44 = tpu.memref_slice %arg3[%1, %c0_i32_29] : memref<50x32xf32, #tpu.memory_space<any>> -> memref<1x32xf32, #tpu.memory_space<any>>
    %c1_i32_30 = arith.constant 1 : i32
    %c0_i32_31 = arith.constant 0 : i32
    %45 = tpu.memref_slice %arg8[%c1_i32_30, %c0_i32_31] : memref<8x32xf32, #tpu.memory_space<vmem>> -> memref<1x32xf32, #tpu.memory_space<vmem>>
    %46 = tpu.memref_slice %arg9[%c1_i32_28] : memref<8x!tpu.dma_semaphore, #tpu.memory_space<semaphore_mem>> -> memref<1x!tpu.dma_semaphore, #tpu.memory_space<semaphore_mem>>
    %47 = tpu.memref_squeeze %46 : memref<1x!tpu.dma_semaphore, #tpu.memory_space<semaphore_mem>> -> memref<!tpu.dma_semaphore, #tpu.memory_space<semaphore_mem>>
    tpu.wait_dma2 semaphore(%47 : memref<!tpu.dma_semaphore, #tpu.memory_space<semaphore_mem>>) src(%44 : memref<1x32xf32, #tpu.memory_space<any>>) dst(%45 : memref<1x32xf32, #tpu.memory_space<vmem>>)
    %c2_i32_32 = arith.constant 2 : i32
    %c0_i32_33 = arith.constant 0 : i32
    %48 = tpu.memref_slice %arg3[%2, %c0_i32_33] : memref<50x32xf32, #tpu.memory_space<any>> -> memref<1x32xf32, #tpu.memory_space<any>>
    %c2_i32_34 = arith.constant 2 : i32
    %c0_i32_35 = arith.constant 0 : i32
    %49 = tpu.memref_slice %arg8[%c2_i32_34, %c0_i32_35] : memref<8x32xf32, #tpu.memory_space<vmem>> -> memref<1x32xf32, #tpu.memory_space<vmem>>
    %50 = tpu.memref_slice %arg9[%c2_i32_32] : memref<8x!tpu.dma_semaphore, #tpu.memory_space<semaphore_mem>> -> memref<1x!tpu.dma_semaphore, #tpu.memory_space<semaphore_mem>>
    %51 = tpu.memref_squeeze %50 : memref<1x!tpu.dma_semaphore, #tpu.memory_space<semaphore_mem>> -> memref<!tpu.dma_semaphore, #tpu.memory_space<semaphore_mem>>
    tpu.wait_dma2 semaphore(%51 : memref<!tpu.dma_semaphore, #tpu.memory_space<semaphore_mem>>) src(%48 : memref<1x32xf32, #tpu.memory_space<any>>) dst(%49 : memref<1x32xf32, #tpu.memory_space<vmem>>)
    %c3_i32_36 = arith.constant 3 : i32
    %c0_i32_37 = arith.constant 0 : i32
    %52 = tpu.memref_slice %arg3[%3, %c0_i32_37] : memref<50x32xf32, #tpu.memory_space<any>> -> memref<1x32xf32, #tpu.memory_space<any>>
    %c3_i32_38 = arith.constant 3 : i32
    %c0_i32_39 = arith.constant 0 : i32
    %53 = tpu.memref_slice %arg8[%c3_i32_38, %c0_i32_39] : memref<8x32xf32, #tpu.memory_space<vmem>> -> memref<1x32xf32, #tpu.memory_space<vmem>>
    %54 = tpu.memref_slice %arg9[%c3_i32_36] : memref<8x!tpu.dma_semaphore, #tpu.memory_space<semaphore_mem>> -> memref<1x!tpu.dma_semaphore, #tpu.memory_space<semaphore_mem>>
    %55 = tpu.memref_squeeze %54 : memref<1x!tpu.dma_semaphore, #tpu.memory_space<semaphore_mem>> -> memref<!tpu.dma_semaphore, #tpu.memory_space<semaphore_mem>>
    tpu.wait_dma2 semaphore(%55 : memref<!tpu.dma_semaphore, #tpu.memory_space<semaphore_mem>>) src(%52 : memref<1x32xf32, #tpu.memory_space<any>>) dst(%53 : memref<1x32xf32, #tpu.memory_space<vmem>>)
    %c4_i32_40 = arith.constant 4 : i32
    %c0_i32_41 = arith.constant 0 : i32
    %56 = tpu.memref_slice %arg3[%4, %c0_i32_41] : memref<50x32xf32, #tpu.memory_space<any>> -> memref<1x32xf32, #tpu.memory_space<any>>
    %c4_i32_42 = arith.constant 4 : i32
    %c0_i32_43 = arith.constant 0 : i32
    %57 = tpu.memref_slice %arg8[%c4_i32_42, %c0_i32_43] : memref<8x32xf32, #tpu.memory_space<vmem>> -> memref<1x32xf32, #tpu.memory_space<vmem>>
    %58 = tpu.memref_slice %arg9[%c4_i32_40] : memref<8x!tpu.dma_semaphore, #tpu.memory_space<semaphore_mem>> -> memref<1x!tpu.dma_semaphore, #tpu.memory_space<semaphore_mem>>
    %59 = tpu.memref_squeeze %58 : memref<1x!tpu.dma_semaphore, #tpu.memory_space<semaphore_mem>> -> memref<!tpu.dma_semaphore, #tpu.memory_space<semaphore_mem>>
    tpu.wait_dma2 semaphore(%59 : memref<!tpu.dma_semaphore, #tpu.memory_space<semaphore_mem>>) src(%56 : memref<1x32xf32, #tpu.memory_space<any>>) dst(%57 : memref<1x32xf32, #tpu.memory_space<vmem>>)
    %c5_i32_44 = arith.constant 5 : i32
    %c0_i32_45 = arith.constant 0 : i32
    %60 = tpu.memref_slice %arg3[%5, %c0_i32_45] : memref<50x32xf32, #tpu.memory_space<any>> -> memref<1x32xf32, #tpu.memory_space<any>>
    %c5_i32_46 = arith.constant 5 : i32
    %c0_i32_47 = arith.constant 0 : i32
    %61 = tpu.memref_slice %arg8[%c5_i32_46, %c0_i32_47] : memref<8x32xf32, #tpu.memory_space<vmem>> -> memref<1x32xf32, #tpu.memory_space<vmem>>
    %62 = tpu.memref_slice %arg9[%c5_i32_44] : memref<8x!tpu.dma_semaphore, #tpu.memory_space<semaphore_mem>> -> memref<1x!tpu.dma_semaphore, #tpu.memory_space<semaphore_mem>>
    %63 = tpu.memref_squeeze %62 : memref<1x!tpu.dma_semaphore, #tpu.memory_space<semaphore_mem>> -> memref<!tpu.dma_semaphore, #tpu.memory_space<semaphore_mem>>
    tpu.wait_dma2 semaphore(%63 : memref<!tpu.dma_semaphore, #tpu.memory_space<semaphore_mem>>) src(%60 : memref<1x32xf32, #tpu.memory_space<any>>) dst(%61 : memref<1x32xf32, #tpu.memory_space<vmem>>)
    %c6_i32_48 = arith.constant 6 : i32
    %c0_i32_49 = arith.constant 0 : i32
    %64 = tpu.memref_slice %arg3[%6, %c0_i32_49] : memref<50x32xf32, #tpu.memory_space<any>> -> memref<1x32xf32, #tpu.memory_space<any>>
    %c6_i32_50 = arith.constant 6 : i32
    %c0_i32_51 = arith.constant 0 : i32
    %65 = tpu.memref_slice %arg8[%c6_i32_50, %c0_i32_51] : memref<8x32xf32, #tpu.memory_space<vmem>> -> memref<1x32xf32, #tpu.memory_space<vmem>>
    %66 = tpu.memref_slice %arg9[%c6_i32_48] : memref<8x!tpu.dma_semaphore, #tpu.memory_space<semaphore_mem>> -> memref<1x!tpu.dma_semaphore, #tpu.memory_space<semaphore_mem>>
    %67 = tpu.memref_squeeze %66 : memref<1x!tpu.dma_semaphore, #tpu.memory_space<semaphore_mem>> -> memref<!tpu.dma_semaphore, #tpu.memory_space<semaphore_mem>>
    tpu.wait_dma2 semaphore(%67 : memref<!tpu.dma_semaphore, #tpu.memory_space<semaphore_mem>>) src(%64 : memref<1x32xf32, #tpu.memory_space<any>>) dst(%65 : memref<1x32xf32, #tpu.memory_space<vmem>>)
    %c7_i32_52 = arith.constant 7 : i32
    %c0_i32_53 = arith.constant 0 : i32
    %68 = tpu.memref_slice %arg3[%7, %c0_i32_53] : memref<50x32xf32, #tpu.memory_space<any>> -> memref<1x32xf32, #tpu.memory_space<any>>
    %c7_i32_54 = arith.constant 7 : i32
    %c0_i32_55 = arith.constant 0 : i32
    %69 = tpu.memref_slice %arg8[%c7_i32_54, %c0_i32_55] : memref<8x32xf32, #tpu.memory_space<vmem>> -> memref<1x32xf32, #tpu.memory_space<vmem>>
    %70 = tpu.memref_slice %arg9[%c7_i32_52] : memref<8x!tpu.dma_semaphore, #tpu.memory_space<semaphore_mem>> -> memref<1x!tpu.dma_semaphore, #tpu.memory_space<semaphore_mem>>
    %71 = tpu.memref_squeeze %70 : memref<1x!tpu.dma_semaphore, #tpu.memory_space<semaphore_mem>> -> memref<!tpu.dma_semaphore, #tpu.memory_space<semaphore_mem>>
    tpu.wait_dma2 semaphore(%71 : memref<!tpu.dma_semaphore, #tpu.memory_space<semaphore_mem>>) src(%68 : memref<1x32xf32, #tpu.memory_space<any>>) dst(%69 : memref<1x32xf32, #tpu.memory_space<vmem>>)
    %c0_56 = arith.constant 0 : index
    %c0_57 = arith.constant 0 : index
    %72 = vector.load %arg1[%c0_56, %c0_57] : memref<8x1xi32, #tpu.memory_space<vmem>>, vector<8x1xi32>
    %c1_i32_58 = arith.constant 1 : i32
    %73 = vector.broadcast %c1_i32_58 : i32 to vector<8x1xi32>
    %74 = arith.cmpi ne, %72, %73 : vector<8x1xi32>
    %75 = arith.extui %74 : vector<8x1xi1> to vector<8x1xi32>
    %76 = arith.sitofp %75 : vector<8x1xi32> to vector<8x1xf32>
    %c0_59 = arith.constant 0 : index
    %c0_60 = arith.constant 0 : index
    %77 = vector.load %arg8[%c0_59, %c0_60] : memref<8x32xf32, #tpu.memory_space<vmem>>, vector<8x32xf32>
    %78 = vector.broadcast %76 : vector<8x1xf32> to vector<8x32xf32>
    %79 = arith.mulf %77, %78 : vector<8x32xf32>
    %80 = arith.truncf %79 : vector<8x32xf32> to vector<8x32xbf16>
    %c0_61 = arith.constant 0 : index
    %c0_62 = arith.constant 0 : index
    %81 = vector.load %arg4[%c0_61, %c0_62] : memref<32x128xbf16, #tpu.memory_space<vmem>>, vector<32x128xbf16>
    %cst = arith.constant dense<0.000000e+00> : vector<8x128xf32>
    %82 = tpu.matmul %80, %81, %cst {dimension_numbers = #tpu.dot_dimension_numbers<[1], [0], [0], [1], [0, 0, 1, 1], [], []>} : vector<8x32xbf16>, vector<32x128xbf16>, vector<8x128xf32> -> vector<8x128xf32>
    %c0_63 = arith.constant 0 : index
    %c0_64 = arith.constant 0 : index
    %83 = vector.load %arg5[%c0_63, %c0_64] : memref<1x128xf32, #tpu.memory_space<vmem>>, vector<1x128xf32>
    %84 = vector.broadcast %83 : vector<1x128xf32> to vector<8x128xf32>
    %85 = arith.addf %82, %84 : vector<8x128xf32>
    %cst_65 = arith.constant dense<0xFF800000> : vector<8xf32>
    %86 = vector.multi_reduction <maximumf>, %85, %cst_65 [1] : vector<8x128xf32> to vector<8xf32>
    %87 = vector.shape_cast %86 : vector<8xf32> to vector<8x1xf32>
    %88 = vector.broadcast %87 : vector<8x1xf32> to vector<8x128xf32>
    %89 = arith.subf %85, %88 : vector<8x128xf32>
    %90 = math.exp %89 : vector<8x128xf32>
    %cst_66 = arith.constant dense<0.000000e+00> : vector<8xf32>
    %91 = vector.multi_reduction <add>, %90, %cst_66 [1] : vector<8x128xf32> to vector<8xf32>
    %92 = vector.shape_cast %91 : vector<8xf32> to vector<8x1xf32>
    %93 = vector.broadcast %92 : vector<8x1xf32> to vector<8x128xf32>
    %94 = arith.divf %90, %93 : vector<8x128xf32>
    %c0_67 = arith.constant 0 : index
    %c0_68 = arith.constant 0 : index
    %95 = vector.load %arg6[%c0_67, %c0_68] : memref<8x128xf32, #tpu.memory_space<vmem>>, vector<8x128xf32>
    tpu.vector_store %arg6[%c0_67, %c0_68], %94 {strides = array<i32>} : memref<8x128xf32, #tpu.memory_space<vmem>>, vector<8x128xf32>,
    %96 = vector.broadcast %87 : vector<8x1xf32> to vector<8x128xf32>
    %97 = arith.subf %85, %96 : vector<8x128xf32>
    %98 = math.log %92 : vector<8x1xf32>
    %99 = vector.broadcast %98 : vector<8x1xf32> to vector<8x128xf32>
    %100 = arith.subf %97, %99 : vector<8x128xf32>
    %101 = tpu.iota {dimensions = array<i32: 1>} : vector<8x128xi32>
    %c0_69 = arith.constant 0 : index
    %c0_70 = arith.constant 0 : index
    %102 = vector.load %arg2[%c0_69, %c0_70] : memref<8x1xi32, #tpu.memory_space<vmem>>, vector<8x1xi32>
    %103 = vector.broadcast %102 : vector<8x1xi32> to vector<8x128xi32>
    %104 = arith.cmpi eq, %101, %103 : vector<8x128xi32>
    %105 = arith.extui %104 : vector<8x128xi1> to vector<8x128xi32>
    %106 = arith.sitofp %105 : vector<8x128xi32> to vector<8x128xf32>
    %107 = tpu.iota {dimensions = array<i32: 0>} : vector<8x1xi32>
    %c2_i32_71 = arith.constant 2 : i32
    %108 = vector.broadcast %c2_i32_71 : i32 to vector<8x1xi32>
    %109 = arith.cmpi slt, %107, %108 : vector<8x1xi32>
    %110 = arith.extui %109 : vector<8x1xi1> to vector<8x1xi32>
    %111 = arith.sitofp %110 : vector<8x1xi32> to vector<8x1xf32>
    %112 = arith.mulf %106, %100 : vector<8x128xf32>
    %cst_72 = arith.constant dense<0.000000e+00> : vector<8xf32>
    %113 = vector.multi_reduction <add>, %112, %cst_72 [1] : vector<8x128xf32> to vector<8xf32>
    %114 = vector.shape_cast %113 : vector<8xf32> to vector<8x1xf32>
    %cst_73 = arith.constant 0.000000e+00 : f32
    %115 = vector.broadcast %cst_73 : f32 to vector<8x1xf32>
    %116 = arith.subf %115, %114 : vector<8x1xf32>
    %117 = arith.mulf %116, %111 : vector<8x1xf32>
    %118 = vector.shape_cast %117 : vector<8x1xf32> to vector<1x8x1xf32>
    %cst_74 = arith.constant dense<0.000000e+00> : vector<1xf32>
    %119 = vector.multi_reduction <add>, %118, %cst_74 [1, 2] : vector<1x8x1xf32> to vector<1xf32>
    %120 = vector.shape_cast %119 : vector<1xf32> to vector<1x1x1xf32>
    %121 = vector.extract %120[0, 0, 0] : f32 from vector<1x1x1xf32>
    %cst_75 = arith.constant 5.000000e-01 : f32
    %122 = arith.mulf %121, %cst_75 : f32
    %c0_76 = arith.constant 0 : index
    %123 = memref.load %arg7[%c0_76] : memref<1xf32, #tpu.memory_space<smem>>
    memref.store %122, %arg7[%c0_76] : memref<1xf32, #tpu.memory_space<smem>>
    return
  }
}

</mosaic_0001>

<llo_original>
// kernel: classifier_head.1
$region0: #{classifier_head.1}
  #allocation0 [shape = 'u32[]', space=smem, size = 0x4, offset = 0x4, fixed_abs, tag = 'smem constant byte address 0x4 - core index']
  #allocation1 [shape = 'u32[144,128]{1,0:T(1,128)}', space=vmem, size = 0x12000, scoped, tag = 'internal scratch']
  #allocation2 [shape = 'f32[8,32]{1,0:T(8,128)}', space=vmem, size = 0x1000, scoped, tag = 'scratch operand']
  #allocation3 [shape = 's32[8]{0}', space=sflag, size = 0x20, scoped, tag = 'scratch operand']
  #allocation8 [shape = 's32[]', space=sflag, size = 0x4, offset = 0, fixed_abs, tag = 'sflag constant byte address 0x0 - dummy sync flag']
  #allocation9 [shape = 's32[]', space=sflag, size = 0x4, offset = 0, fixed_abs, tag = 'sflag constant byte address 0x0 - dummy sync flag']
  #allocation10 [shape = 's32[]', space=sflag, size = 0x4, offset = 0, fixed_abs, tag = 'sflag constant byte address 0x0 - dummy sync flag']
  #allocation11 [shape = 's32[]', space=sflag, size = 0x4, offset = 0, fixed_abs, tag = 'sflag constant byte address 0x0 - dummy sync flag']
  #allocation12 [shape = 's32[]', space=sflag, size = 0x4, offset = 0, fixed_abs, tag = 'sflag constant byte address 0x0 - dummy sync flag']
  #allocation13 [shape = 's32[]', space=sflag, size = 0x4, offset = 0, fixed_abs, tag = 'sflag constant byte address 0x0 - dummy sync flag']
  #allocation14 [shape = 's32[]', space=sflag, size = 0x4, offset = 0, fixed_abs, tag = 'sflag constant byte address 0x0 - dummy sync flag']
  #allocation15 [shape = 's32[]', space=sflag, size = 0x4, offset = 0, fixed_abs, tag = 'sflag constant byte address 0x0 - dummy sync flag']
  %s0 = inlined_call_operand.vmem [shape: s32[8], index: 0, kind: input, shape index: {}]
  %s1 = inlined_call_operand.vmem [shape: s32[8,1], index: 1, kind: input, shape index: {}]
  %s2 = inlined_call_operand.vmem [shape: s32[8,1], index: 2, kind: input, shape index: {}]
  %s3 = inlined_call_operand.vmem [shape: f32[50,32], index: 3, kind: input, shape index: {}]
  %s4 = inlined_call_operand.vmem [shape: bf16[32,128], index: 4, kind: input, shape index: {}]
  %s5 = inlined_call_operand.vmem [shape: f32[1,128], index: 5, kind: input, shape index: {}]
  %s6 = inlined_call_operand.vmem [shape: f32[8,128], index: 6, kind: output, shape index: {0}]
  %s7 = inlined_call_operand.hbm [shape: f32[1], index: 7, kind: output, shape index: {1}]
  %8 = xla_tuple %s6, %s7
  %s9 = sld [smem:[#allocation0]]
  $region282: #{classifier_head.1} parent=0
    _
  %s11 = ssub.s32 1, %s9
  %s12 = scalar_select 0, %s11, %s9
  $region1: #{classifier_head.1} parent=0
    #allocation4 [shape = 'u8[512]{0}', space=smem, size = 0x200, scoped, tag = 'input window, operand 0, single buffered']
    #allocation5 [shape = 's32[1]{0}', space=sflag, size = 0x4, scoped, tag = 'scoped memory for classifier_head.1']
    #allocation6 [shape = 's32[1]{0}', space=sflag, size = 0x4, scoped, tag = 'scoped memory for classifier_head.1']
    #allocation7 [shape = 'u8[512]{0}', space=smem, size = 0x200, scoped, tag = 'output window, operand 1, single buffered']
    %13 = vsyncpa [#allocation6], 0
    %14 = vsyncpa [#allocation5], 0
    // Predicated region
    $region2: #{classifier_head.1} parent=1 // pred_check
      _
    $region3: #{classifier_head.1} parent=1 // pred_check_branch
      %16 = sbr.rel (0) target = $region5
    $region4: #{classifier_head.1} parent=1 // pred_region
      %s18 = ssub.s32 16, 16
      %19 = vsyncadd [#allocation6], %s18
      %s21 = sshll.u32 %s0, 4
      %s22 = int_to_ptr.vmem [resolvable:$true] %s21
      %24 = dma.vmem_to_smem %s22, 16, [#allocation4], [#allocation6]
    $region5: #{classifier_head.1} parent=1 // pred_fallthru
      _
    // Predicated region
    $region6: #{classifier_head.1} parent=1 // pred_check
      _
    $region7: #{classifier_head.1} parent=1 // pred_check_branch
      %26 = sbr.rel (0) target = $region9
    $region8: #{classifier_head.1} parent=1 // pred_region
      _
    $region9: #{classifier_head.1} parent=1 // pred_fallthru
      _
    // Predicated region
    $region10: #{classifier_head.1} parent=1 // pred_check
      _
    $region11: #{classifier_head.1} parent=1 // pred_check_branch
      %28 = sbr.rel (0) target = $region13
    $region12: #{classifier_head.1} parent=1 // pred_region
      _
    $region13: #{classifier_head.1} parent=1 // pred_fallthru
      _
    // Predicated region
    $region14: #{classifier_head.1} parent=1 // pred_check
      _
    $region15: #{classifier_head.1} parent=1 // pred_check_branch
      %30 = sbr.rel (0) target = $region17
    $region16: #{classifier_head.1} parent=1 // pred_region
      _
    $region17: #{classifier_head.1} parent=1 // pred_fallthru
      _
    // Predicated region
    $region18: #{classifier_head.1} parent=1 // pred_check
      _
    $region19: #{classifier_head.1} parent=1 // pred_check_branch
      %32 = sbr.rel (0) target = $region21
    $region20: #{classifier_head.1} parent=1 // pred_region
      _
    $region21: #{classifier_head.1} parent=1 // pred_fallthru
      _
    // Predicated region
    $region22: #{classifier_head.1} parent=1 // pred_check
      _
    $region23: #{classifier_head.1} parent=1 // pred_check_branch
      %34 = sbr.rel (0) target = $region25
    $region24: #{classifier_head.1} parent=1 // pred_region
      %35 = dma.done [#allocation6], 16
    $region25: #{classifier_head.1} parent=1 // pred_fallthru
      _
    %36 = sfence
    %s38 = sld [smem:[#allocation4]]
    %s39 = sld [smem:[#allocation4 + $0x1]]
    %s40 = sld [smem:[#allocation4 + $0x2]]
    %s41 = sld [smem:[#allocation4 + $0x3]]
    %s42 = sld [smem:[#allocation4 + $0x4]]
    %s43 = sld [smem:[#allocation4 + $0x5]]
    %s44 = sld [smem:[#allocation4 + $0x6]]
    %s45 = sld [smem:[#allocation4 + $0x7]]
    %s46 = scalar_lea.vmem %s3, %s38
    %p48 = scmp.lt.u32.totalorder 1, 8
    %p49 = pneg %p48
    // Predicated region
    $region26: #{classifier_head.1} parent=1 // pred_check
      _
    $region27: #{classifier_head.1} parent=1 // pred_check_branch
      %51 = sbr.rel (%p48) target = $region29
    $region28: #{classifier_head.1} parent=1 // pred_region
      %s66 = sand.u32 1, 7
      %p67 = scmp.eq.s32.totalorder %s66, 0
      %p68 = pneg %p67
      // Predicated region
      $region41: #{classifier_head.1} parent=28 // pred_check
        _
      $region42: #{classifier_head.1} parent=28 // pred_check_branch
        %70 = sbr.rel (%p67) target = $region44
      $region43: #{classifier_head.1} parent=28 // pred_region
        %s71 = sand.u32 1, 7
        %s72 = ssub.s32 1, %s71
        %s73 = scalar_lea.vmem %s46, %s72
        %s74 = ssub.s32 1, %s71
        %s75 = scalar_lea.vmem [#allocation2], %s74
        %s76 = sshllo.u32 0, %s71
        loop: start=0, step=1, limit=1
        $region45: #{classifier_head.1} parent=43 // loop_pre_header
          _
        $region46: #{classifier_head.1} parent=43 // loop_header
          %s78 = sphi 0, %s82
          %p79 = scmp.ge.s32.totalorder %s78, 1
          %s83 = sphi %s73, %s73
          %s84 = sphi %s75, %s75
        $region47: #{classifier_head.1} parent=43 // loop_header_branch
          %81 = sbr.rel (%p79) target = $region51
        $region48: #{classifier_head.1} parent=43 // loop_body
          %v85 = vld [vmem:[%s83] sm:%s76]
          %86 = vst [vmem:[%s84] sm:%s76] %v85
        $region49: #{classifier_head.1} parent=43 // loop_footer
          %s82 = sadd.s32 1, %s78
        $region50: #{classifier_head.1} parent=43 // loop_footer_branch
          %77 = sbr.rel target = $region46
        $region51: #{classifier_head.1} parent=43 // loop_exit
          _
      $region44: #{classifier_head.1} parent=28 // pred_fallthru
        _
    $region29: #{classifier_head.1} parent=1 // pred_fallthru
      _
    // Predicated region
    $region30: #{classifier_head.1} parent=1 // pred_check
      %p52 = pneg %p48
    $region31: #{classifier_head.1} parent=1 // pred_check_branch
      %54 = sbr.rel (%p52) target = $region33
    $region32: #{classifier_head.1} parent=1 // pred_region
      %s55 = sshllo.u32 0, 1
      loop: start=0, step=1, limit=1
      $region34: #{classifier_head.1} parent=32 // loop_pre_header
        _
      $region35: #{classifier_head.1} parent=32 // loop_header
        %s57 = sphi 0, %s61
        %p58 = scmp.ge.s32.totalorder %s57, 1
        %s62 = sphi %s46, %s46
        %s63 = sphi [#allocation2], [#allocation2]
      $region36: #{classifier_head.1} parent=32 // loop_header_branch
        %60 = sbr.rel (%p58) target = $region40
      $region37: #{classifier_head.1} parent=32 // loop_body
        %v64 = vld [vmem:[%s62] sm:%s55]
        %65 = vst [vmem:[%s63] sm:%s55] %v64
      $region38: #{classifier_head.1} parent=32 // loop_footer
        %s61 = sadd.s32 1, %s57
      $region39: #{classifier_head.1} parent=32 // loop_footer_branch
        %56 = sbr.rel target = $region35
      $region40: #{classifier_head.1} parent=32 // loop_exit
        _
    $region33: #{classifier_head.1} parent=1 // pred_fallthru
      _
    // Predicated region
    $region52: #{classifier_head.1} parent=1 // pred_check
      _
    $region53: #{classifier_head.1} parent=1 // pred_check_branch
      %89 = sbr.rel (0) target = $region55
    $region54: #{classifier_head.1} parent=1 // pred_region
      %90 = vsyncadd [#allocation3], 16
    $region55: #{classifier_head.1} parent=1 // pred_fallthru
      _
    %s91 = scalar_lea.vmem %s3, %s39
    %s92 = scalar_lea.vmem [#allocation2], 1
    %s93 = scalar_lea.sflag [#allocation3], 1
    %p95 = scmp.lt.u32.totalorder 1, 8
    %p96 = pneg %p95
    // Predicated region
    $region56: #{classifier_head.1} parent=1 // pred_check
      _
    $region57: #{classifier_head.1} parent=1 // pred_check_branch
      %98 = sbr.rel (%p95) target = $region59
    $region58: #{classifier_head.1} parent=1 // pred_region
      %s113 = sand.u32 1, 7
      %p114 = scmp.eq.s32.totalorder %s113, 0
      %p115 = pneg %p114
      // Predicated region
      $region71: #{classifier_head.1} parent=58 // pred_check
        _
      $region72: #{classifier_head.1} parent=58 // pred_check_branch
        %117 = sbr.rel (%p114) target = $region74
      $region73: #{classifier_head.1} parent=58 // pred_region
        %s118 = sand.u32 1, 7
        %s119 = ssub.s32 1, %s118
        %s120 = scalar_lea.vmem %s91, %s119
        %s121 = ssub.s32 1, %s118
        %s122 = scalar_lea.vmem %s92, %s121 [#allocation2]
        %s123 = sshllo.u32 0, %s118
        loop: start=0, step=1, limit=1
        $region75: #{classifier_head.1} parent=73 // loop_pre_header
          _
        $region76: #{classifier_head.1} parent=73 // loop_header
          %s125 = sphi 0, %s129
          %p126 = scmp.ge.s32.totalorder %s125, 1
          %s130 = sphi %s120, %s120
          %s131 = sphi %s122, %s122
        $region77: #{classifier_head.1} parent=73 // loop_header_branch
          %128 = sbr.rel (%p126) target = $region81
        $region78: #{classifier_head.1} parent=73 // loop_body
          %v132 = vld [vmem:[%s130] sm:%s123]
          %133 = vst [vmem:[%s131] sm:%s123] %v132
        $region79: #{classifier_head.1} parent=73 // loop_footer
          %s129 = sadd.s32 1, %s125
        $region80: #{classifier_head.1} parent=73 // loop_footer_branch
          %124 = sbr.rel target = $region76
        $region81: #{classifier_head.1} parent=73 // loop_exit
          _
      $region74: #{classifier_head.1} parent=58 // pred_fallthru
        _
    $region59: #{classifier_head.1} parent=1 // pred_fallthru
      _
    // Predicated region
    $region60: #{classifier_head.1} parent=1 // pred_check
      %p99 = pneg %p95
    $region61: #{classifier_head.1} parent=1 // pred_check_branch
      %101 = sbr.rel (%p99) target = $region63
    $region62: #{classifier_head.1} parent=1 // pred_region
      %s102 = sshllo.u32 0, 1
      loop: start=0, step=1, limit=1
      $region64: #{classifier_head.1} parent=62 // loop_pre_header
        _
      $region65: #{classifier_head.1} parent=62 // loop_header
        %s104 = sphi 0, %s108
        %p105 = scmp.ge.s32.totalorder %s104, 1
        %s109 = sphi %s91, %s91
        %s110 = sphi %s92, %s92
      $region66: #{classifier_head.1} parent=62 // loop_header_branch
        %107 = sbr.rel (%p105) target = $region70
      $region67: #{classifier_head.1} parent=62 // loop_body
        %v111 = vld [vmem:[%s109] sm:%s102]
        %112 = vst [vmem:[%s110] sm:%s102] %v111
      $region68: #{classifier_head.1} parent=62 // loop_footer
        %s108 = sadd.s32 1, %s104
      $region69: #{classifier_head.1} parent=62 // loop_footer_branch
        %103 = sbr.rel target = $region65
      $region70: #{classifier_head.1} parent=62 // loop_exit
        _
    $region63: #{classifier_head.1} parent=1 // pred_fallthru
      _
    // Predicated region
    $region82: #{classifier_head.1} parent=1 // pred_check
      _
    $region83: #{classifier_head.1} parent=1 // pred_check_branch
      %136 = sbr.rel (0) target = $region85
    $region84: #{classifier_head.1} parent=1 // pred_region
      %137 = vsyncadd %s93, 16
    $region85: #{classifier_head.1} parent=1 // pred_fallthru
      _
    %s138 = scalar_lea.vmem %s3, %s40
    %s139 = scalar_lea.vmem [#allocation2], 2
    %s140 = scalar_lea.sflag [#allocation3], 2
    %p142 = scmp.lt.u32.totalorder 1, 8
    %p143 = pneg %p142
    // Predicated region
    $region86: #{classifier_head.1} parent=1 // pred_check
      _
    $region87: #{classifier_head.1} parent=1 // pred_check_branch
      %145 = sbr.rel (%p142) target = $region89
    $region88: #{classifier_head.1} parent=1 // pred_region
      %s160 = sand.u32 1, 7
      %p161 = scmp.eq.s32.totalorder %s160, 0
      %p162 = pneg %p161
      // Predicated region
      $region101: #{classifier_head.1} parent=88 // pred_check
        _
      $region102: #{classifier_head.1} parent=88 // pred_check_branch
        %164 = sbr.rel (%p161) target = $region104
      $region103: #{classifier_head.1} parent=88 // pred_region
        %s165 = sand.u32 1, 7
        %s166 = ssub.s32 1, %s165
        %s167 = scalar_lea.vmem %s138, %s166
        %s168 = ssub.s32 1, %s165
        %s169 = scalar_lea.vmem %s139, %s168 [#allocation2]
        %s170 = sshllo.u32 0, %s165
        loop: start=0, step=1, limit=1
        $region105: #{classifier_head.1} parent=103 // loop_pre_header
          _
        $region106: #{classifier_head.1} parent=103 // loop_header
          %s172 = sphi 0, %s176
          %p173 = scmp.ge.s32.totalorder %s172, 1
          %s177 = sphi %s167, %s167
          %s178 = sphi %s169, %s169
        $region107: #{classifier_head.1} parent=103 // loop_header_branch
          %175 = sbr.rel (%p173) target = $region111
        $region108: #{classifier_head.1} parent=103 // loop_body
          %v179 = vld [vmem:[%s177] sm:%s170]
          %180 = vst [vmem:[%s178] sm:%s170] %v179
        $region109: #{classifier_head.1} parent=103 // loop_footer
          %s176 = sadd.s32 1, %s172
        $region110: #{classifier_head.1} parent=103 // loop_footer_branch
          %171 = sbr.rel target = $region106
        $region111: #{classifier_head.1} parent=103 // loop_exit
          _
      $region104: #{classifier_head.1} parent=88 // pred_fallthru
        _
    $region89: #{classifier_head.1} parent=1 // pred_fallthru
      _
    // Predicated region
    $region90: #{classifier_head.1} parent=1 // pred_check
      %p146 = pneg %p142
    $region91: #{classifier_head.1} parent=1 // pred_check_branch
      %148 = sbr.rel (%p146) target = $region93
    $region92: #{classifier_head.1} parent=1 // pred_region
      %s149 = sshllo.u32 0, 1
      loop: start=0, step=1, limit=1
      $region94: #{classifier_head.1} parent=92 // loop_pre_header
        _
      $region95: #{classifier_head.1} parent=92 // loop_header
        %s151 = sphi 0, %s155
        %p152 = scmp.ge.s32.totalorder %s151, 1
        %s156 = sphi %s138, %s138
        %s157 = sphi %s139, %s139
      $region96: #{classifier_head.1} parent=92 // loop_header_branch
        %154 = sbr.rel (%p152) target = $region100
      $region97: #{classifier_head.1} parent=92 // loop_body
        %v158 = vld [vmem:[%s156] sm:%s149]
        %159 = vst [vmem:[%s157] sm:%s149] %v158
      $region98: #{classifier_head.1} parent=92 // loop_footer
        %s155 = sadd.s32 1, %s151
      $region99: #{classifier_head.1} parent=92 // loop_footer_branch
        %150 = sbr.rel target = $region95
      $region100: #{classifier_head.1} parent=92 // loop_exit
        _
    $region93: #{classifier_head.1} parent=1 // pred_fallthru
      _
    // Predicated region
    $region112: #{classifier_head.1} parent=1 // pred_check
      _
    $region113: #{classifier_head.1} parent=1 // pred_check_branch
      %183 = sbr.rel (0) target = $region115
    $region114: #{classifier_head.1} parent=1 // pred_region
      %184 = vsyncadd %s140, 16
    $region115: #{classifier_head.1} parent=1 // pred_fallthru
      _
    %s185 = scalar_lea.vmem %s3, %s41
    %s186 = scalar_lea.vmem [#allocation2], 3
    %s187 = scalar_lea.sflag [#allocation3], 3
    %p189 = scmp.lt.u32.totalorder 1, 8
    %p190 = pneg %p189
    // Predicated region
    $region116: #{classifier_head.1} parent=1 // pred_check
      _
    $region117: #{classifier_head.1} parent=1 // pred_check_branch
      %192 = sbr.rel (%p189) target = $region119
    $region118: #{classifier_head.1} parent=1 // pred_region
      %s207 = sand.u32 1, 7
      %p208 = scmp.eq.s32.totalorder %s207, 0
      %p209 = pneg %p208
      // Predicated region
      $region131: #{classifier_head.1} parent=118 // pred_check
        _
      $region132: #{classifier_head.1} parent=118 // pred_check_branch
        %211 = sbr.rel (%p208) target = $region134
      $region133: #{classifier_head.1} parent=118 // pred_region
        %s212 = sand.u32 1, 7
        %s213 = ssub.s32 1, %s212
        %s214 = scalar_lea.vmem %s185, %s213
        %s215 = ssub.s32 1, %s212
        %s216 = scalar_lea.vmem %s186, %s215 [#allocation2]
        %s217 = sshllo.u32 0, %s212
        loop: start=0, step=1, limit=1
        $region135: #{classifier_head.1} parent=133 // loop_pre_header
          _
        $region136: #{classifier_head.1} parent=133 // loop_header
          %s219 = sphi 0, %s223
          %p220 = scmp.ge.s32.totalorder %s219, 1
          %s224 = sphi %s214, %s214
          %s225 = sphi %s216, %s216
        $region137: #{classifier_head.1} parent=133 // loop_header_branch
          %222 = sbr.rel (%p220) target = $region141
        $region138: #{classifier_head.1} parent=133 // loop_body
          %v226 = vld [vmem:[%s224] sm:%s217]
          %227 = vst [vmem:[%s225] sm:%s217] %v226
        $region139: #{classifier_head.1} parent=133 // loop_footer
          %s223 = sadd.s32 1, %s219
        $region140: #{classifier_head.1} parent=133 // loop_footer_branch
          %218 = sbr.rel target = $region136
        $region141: #{classifier_head.1} parent=133 // loop_exit
          _
      $region134: #{classifier_head.1} parent=118 // pred_fallthru
        _
    $region119: #{classifier_head.1} parent=1 // pred_fallthru
      _
    // Predicated region
    $region120: #{classifier_head.1} parent=1 // pred_check
      %p193 = pneg %p189
    $region121: #{classifier_head.1} parent=1 // pred_check_branch
      %195 = sbr.rel (%p193) target = $region123
    $region122: #{classifier_head.1} parent=1 // pred_region
      %s196 = sshllo.u32 0, 1
      loop: start=0, step=1, limit=1
      $region124: #{classifier_head.1} parent=122 // loop_pre_header
        _
      $region125: #{classifier_head.1} parent=122 // loop_header
        %s198 = sphi 0, %s202
        %p199 = scmp.ge.s32.totalorder %s198, 1
        %s203 = sphi %s185, %s185
        %s204 = sphi %s186, %s186
      $region126: #{classifier_head.1} parent=122 // loop_header_branch
        %201 = sbr.rel (%p199) target = $region130
      $region127: #{classifier_head.1} parent=122 // loop_body
        %v205 = vld [vmem:[%s203] sm:%s196]
        %206 = vst [vmem:[%s204] sm:%s196] %v205
      $region128: #{classifier_head.1} parent=122 // loop_footer
        %s202 = sadd.s32 1, %s198
      $region129: #{classifier_head.1} parent=122 // loop_footer_branch
        %197 = sbr.rel target = $region125
      $region130: #{classifier_head.1} parent=122 // loop_exit
        _
    $region123: #{classifier_head.1} parent=1 // pred_fallthru
      _
    // Predicated region
    $region142: #{classifier_head.1} parent=1 // pred_check
      _
    $region143: #{classifier_head.1} parent=1 // pred_check_branch
      %230 = sbr.rel (0) target = $region145
    $region144: #{classifier_head.1} parent=1 // pred_region
      %231 = vsyncadd %s187, 16
    $region145: #{classifier_head.1} parent=1 // pred_fallthru
      _
    %s232 = scalar_lea.vmem %s3, %s42
    %s233 = scalar_lea.vmem [#allocation2], 4
    %s234 = scalar_lea.sflag [#allocation3], 4
    %p236 = scmp.lt.u32.totalorder 1, 8
    %p237 = pneg %p236
    // Predicated region
    $region146: #{classifier_head.1} parent=1 // pred_check
      _
    $region147: #{classifier_head.1} parent=1 // pred_check_branch
      %239 = sbr.rel (%p236) target = $region149
    $region148: #{classifier_head.1} parent=1 // pred_region
      %s254 = sand.u32 1, 7
      %p255 = scmp.eq.s32.totalorder %s254, 0
      %p256 = pneg %p255
      // Predicated region
      $region161: #{classifier_head.1} parent=148 // pred_check
        _
      $region162: #{classifier_head.1} parent=148 // pred_check_branch
        %258 = sbr.rel (%p255) target = $region164
      $region163: #{classifier_head.1} parent=148 // pred_region
        %s259 = sand.u32 1, 7
        %s260 = ssub.s32 1, %s259
        %s261 = scalar_lea.vmem %s232, %s260
        %s262 = ssub.s32 1, %s259
        %s263 = scalar_lea.vmem %s233, %s262 [#allocation2]
        %s264 = sshllo.u32 0, %s259
        loop: start=0, step=1, limit=1
        $region165: #{classifier_head.1} parent=163 // loop_pre_header
          _
        $region166: #{classifier_head.1} parent=163 // loop_header
          %s266 = sphi 0, %s270
          %p267 = scmp.ge.s32.totalorder %s266, 1
          %s271 = sphi %s261, %s261
          %s272 = sphi %s263, %s263
        $region167: #{classifier_head.1} parent=163 // loop_header_branch
          %269 = sbr.rel (%p267) target = $region171
        $region168: #{classifier_head.1} parent=163 // loop_body
          %v273 = vld [vmem:[%s271] sm:%s264]
          %274 = vst [vmem:[%s272] sm:%s264] %v273
        $region169: #{classifier_head.1} parent=163 // loop_footer
          %s270 = sadd.s32 1, %s266
        $region170: #{classifier_head.1} parent=163 // loop_footer_branch
          %265 = sbr.rel target = $region166
        $region171: #{classifier_head.1} parent=163 // loop_exit
          _
      $region164: #{classifier_head.1} parent=148 // pred_fallthru
        _
    $region149: #{classifier_head.1} parent=1 // pred_fallthru
      _
    // Predicated region
    $region150: #{classifier_head.1} parent=1 // pred_check
      %p240 = pneg %p236
    $region151: #{classifier_head.1} parent=1 // pred_check_branch
      %242 = sbr.rel (%p240) target = $region153
    $region152: #{classifier_head.1} parent=1 // pred_region
      %s243 = sshllo.u32 0, 1
      loop: start=0, step=1, limit=1
      $region154: #{classifier_head.1} parent=152 // loop_pre_header
        _
      $region155: #{classifier_head.1} parent=152 // loop_header
        %s245 = sphi 0, %s249
        %p246 = scmp.ge.s32.totalorder %s245, 1
        %s250 = sphi %s232, %s232
        %s251 = sphi %s233, %s233
      $region156: #{classifier_head.1} parent=152 // loop_header_branch
        %248 = sbr.rel (%p246) target = $region160
      $region157: #{classifier_head.1} parent=152 // loop_body
        %v252 = vld [vmem:[%s250] sm:%s243]
        %253 = vst [vmem:[%s251] sm:%s243] %v252
      $region158: #{classifier_head.1} parent=152 // loop_footer
        %s249 = sadd.s32 1, %s245
      $region159: #{classifier_head.1} parent=152 // loop_footer_branch
        %244 = sbr.rel target = $region155
      $region160: #{classifier_head.1} parent=152 // loop_exit
        _
    $region153: #{classifier_head.1} parent=1 // pred_fallthru
      _
    // Predicated region
    $region172: #{classifier_head.1} parent=1 // pred_check
      _
    $region173: #{classifier_head.1} parent=1 // pred_check_branch
      %277 = sbr.rel (0) target = $region175
    $region174: #{classifier_head.1} parent=1 // pred_region
      %278 = vsyncadd %s234, 16
    $region175: #{classifier_head.1} parent=1 // pred_fallthru
      _
    %s279 = scalar_lea.vmem %s3, %s43
    %s280 = scalar_lea.vmem [#allocation2], 5
    %s281 = scalar_lea.sflag [#allocation3], 5
    %p283 = scmp.lt.u32.totalorder 1, 8
    %p284 = pneg %p283
    // Predicated region
    $region176: #{classifier_head.1} parent=1 // pred_check
      _
    $region177: #{classifier_head.1} parent=1 // pred_check_branch
      %286 = sbr.rel (%p283) target = $region179
    $region178: #{classifier_head.1} parent=1 // pred_region
      %s301 = sand.u32 1, 7
      %p302 = scmp.eq.s32.totalorder %s301, 0
      %p303 = pneg %p302
      // Predicated region
      $region191: #{classifier_head.1} parent=178 // pred_check
        _
      $region192: #{classifier_head.1} parent=178 // pred_check_branch
        %305 = sbr.rel (%p302) target = $region194
      $region193: #{classifier_head.1} parent=178 // pred_region
        %s306 = sand.u32 1, 7
        %s307 = ssub.s32 1, %s306
        %s308 = scalar_lea.vmem %s279, %s307
        %s309 = ssub.s32 1, %s306
        %s310 = scalar_lea.vmem %s280, %s309 [#allocation2]
        %s311 = sshllo.u32 0, %s306
        loop: start=0, step=1, limit=1
        $region195: #{classifier_head.1} parent=193 // loop_pre_header
          _
        $region196: #{classifier_head.1} parent=193 // loop_header
          %s313 = sphi 0, %s317
          %p314 = scmp.ge.s32.totalorder %s313, 1
          %s318 = sphi %s308, %s308
          %s319 = sphi %s310, %s310
        $region197: #{classifier_head.1} parent=193 // loop_header_branch
          %316 = sbr.rel (%p314) target = $region201
        $region198: #{classifier_head.1} parent=193 // loop_body
          %v320 = vld [vmem:[%s318] sm:%s311]
          %321 = vst [vmem:[%s319] sm:%s311] %v320
        $region199: #{classifier_head.1} parent=193 // loop_footer
          %s317 = sadd.s32 1, %s313
        $region200: #{classifier_head.1} parent=193 // loop_footer_branch
          %312 = sbr.rel target = $region196
        $region201: #{classifier_head.1} parent=193 // loop_exit
          _
      $region194: #{classifier_head.1} parent=178 // pred_fallthru
        _
    $region179: #{classifier_head.1} parent=1 // pred_fallthru
      _
    // Predicated region
    $region180: #{classifier_head.1} parent=1 // pred_check
      %p287 = pneg %p283
    $region181: #{classifier_head.1} parent=1 // pred_check_branch
      %289 = sbr.rel (%p287) target = $region183
    $region182: #{classifier_head.1} parent=1 // pred_region
      %s290 = sshllo.u32 0, 1
      loop: start=0, step=1, limit=1
      $region184: #{classifier_head.1} parent=182 // loop_pre_header
        _
      $region185: #{classifier_head.1} parent=182 // loop_header
        %s292 = sphi 0, %s296
        %p293 = scmp.ge.s32.totalorder %s292, 1
        %s297 = sphi %s279, %s279
        %s298 = sphi %s280, %s280
      $region186: #{classifier_head.1} parent=182 // loop_header_branch
        %295 = sbr.rel (%p293) target = $region190
      $region187: #{classifier_head.1} parent=182 // loop_body
        %v299 = vld [vmem:[%s297] sm:%s290]
        %300 = vst [vmem:[%s298] sm:%s290] %v299
      $region188: #{classifier_head.1} parent=182 // loop_footer
        %s296 = sadd.s32 1, %s292
      $region189: #{classifier_head.1} parent=182 // loop_footer_branch
        %291 = sbr.rel target = $region185
      $region190: #{classifier_head.1} parent=182 // loop_exit
        _
    $region183: #{classifier_head.1} parent=1 // pred_fallthru
      _
    // Predicated region
    $region202: #{classifier_head.1} parent=1 // pred_check
      _
    $region203: #{classifier_head.1} parent=1 // pred_check_branch
      %324 = sbr.rel (0) target = $region205
    $region204: #{classifier_head.1} parent=1 // pred_region
      %325 = vsyncadd %s281, 16
    $region205: #{classifier_head.1} parent=1 // pred_fallthru
      _
    %s326 = scalar_lea.vmem %s3, %s44
    %s327 = scalar_lea.vmem [#allocation2], 6
    %s328 = scalar_lea.sflag [#allocation3], 6
    %p330 = scmp.lt.u32.totalorder 1, 8
    %p331 = pneg %p330
    // Predicated region
    $region206: #{classifier_head.1} parent=1 // pred_check
      _
    $region207: #{classifier_head.1} parent=1 // pred_check_branch
      %333 = sbr.rel (%p330) target = $region209
    $region208: #{classifier_head.1} parent=1 // pred_region
      %s348 = sand.u32 1, 7
      %p349 = scmp.eq.s32.totalorder %s348, 0
      %p350 = pneg %p349
      // Predicated region
      $region221: #{classifier_head.1} parent=208 // pred_check
        _
      $region222: #{classifier_head.1} parent=208 // pred_check_branch
        %352 = sbr.rel (%p349) target = $region224
      $region223: #{classifier_head.1} parent=208 // pred_region
        %s353 = sand.u32 1, 7
        %s354 = ssub.s32 1, %s353
        %s355 = scalar_lea.vmem %s326, %s354
        %s356 = ssub.s32 1, %s353
        %s357 = scalar_lea.vmem %s327, %s356 [#allocation2]
        %s358 = sshllo.u32 0, %s353
        loop: start=0, step=1, limit=1
        $region225: #{classifier_head.1} parent=223 // loop_pre_header
          _
        $region226: #{classifier_head.1} parent=223 // loop_header
          %s360 = sphi 0, %s364
          %p361 = scmp.ge.s32.totalorder %s360, 1
          %s365 = sphi %s355, %s355
          %s366 = sphi %s357, %s357
        $region227: #{classifier_head.1} parent=223 // loop_header_branch
          %363 = sbr.rel (%p361) target = $region231
        $region228: #{classifier_head.1} parent=223 // loop_body
          %v367 = vld [vmem:[%s365] sm:%s358]
          %368 = vst [vmem:[%s366] sm:%s358] %v367
        $region229: #{classifier_head.1} parent=223 // loop_footer
          %s364 = sadd.s32 1, %s360
        $region230: #{classifier_head.1} parent=223 // loop_footer_branch
          %359 = sbr.rel target = $region226
        $region231: #{classifier_head.1} parent=223 // loop_exit
          _
      $region224: #{classifier_head.1} parent=208 // pred_fallthru
        _
    $region209: #{classifier_head.1} parent=1 // pred_fallthru
      _
    // Predicated region
    $region210: #{classifier_head.1} parent=1 // pred_check
      %p334 = pneg %p330
    $region211: #{classifier_head.1} parent=1 // pred_check_branch
      %336 = sbr.rel (%p334) target = $region213
    $region212: #{classifier_head.1} parent=1 // pred_region
      %s337 = sshllo.u32 0, 1
      loop: start=0, step=1, limit=1
      $region214: #{classifier_head.1} parent=212 // loop_pre_header
        _
      $region215: #{classifier_head.1} parent=212 // loop_header
        %s339 = sphi 0, %s343
        %p340 = scmp.ge.s32.totalorder %s339, 1
        %s344 = sphi %s326, %s326
        %s345 = sphi %s327, %s327
      $region216: #{classifier_head.1} parent=212 // loop_header_branch
        %342 = sbr.rel (%p340) target = $region220
      $region217: #{classifier_head.1} parent=212 // loop_body
        %v346 = vld [vmem:[%s344] sm:%s337]
        %347 = vst [vmem:[%s345] sm:%s337] %v346
      $region218: #{classifier_head.1} parent=212 // loop_footer
        %s343 = sadd.s32 1, %s339
      $region219: #{classifier_head.1} parent=212 // loop_footer_branch
        %338 = sbr.rel target = $region215
      $region220: #{classifier_head.1} parent=212 // loop_exit
        _
    $region213: #{classifier_head.1} parent=1 // pred_fallthru
      _
    // Predicated region
    $region232: #{classifier_head.1} parent=1 // pred_check
      _
    $region233: #{classifier_head.1} parent=1 // pred_check_branch
      %371 = sbr.rel (0) target = $region235
    $region234: #{classifier_head.1} parent=1 // pred_region
      %372 = vsyncadd %s328, 16
    $region235: #{classifier_head.1} parent=1 // pred_fallthru
      _
    %s373 = scalar_lea.vmem %s3, %s45
    %s374 = scalar_lea.vmem [#allocation2], 7
    %s375 = scalar_lea.sflag [#allocation3], 7
    %p377 = scmp.lt.u32.totalorder 1, 8
    %p378 = pneg %p377
    // Predicated region
    $region236: #{classifier_head.1} parent=1 // pred_check
      _
    $region237: #{classifier_head.1} parent=1 // pred_check_branch
      %380 = sbr.rel (%p377) target = $region239
    $region238: #{classifier_head.1} parent=1 // pred_region
      %s395 = sand.u32 1, 7
      %p396 = scmp.eq.s32.totalorder %s395, 0
      %p397 = pneg %p396
      // Predicated region
      $region251: #{classifier_head.1} parent=238 // pred_check
        _
      $region252: #{classifier_head.1} parent=238 // pred_check_branch
        %399 = sbr.rel (%p396) target = $region254
      $region253: #{classifier_head.1} parent=238 // pred_region
        %s400 = sand.u32 1, 7
        %s401 = ssub.s32 1, %s400
        %s402 = scalar_lea.vmem %s373, %s401
        %s403 = ssub.s32 1, %s400
        %s404 = scalar_lea.vmem %s374, %s403 [#allocation2]
        %s405 = sshllo.u32 0, %s400
        loop: start=0, step=1, limit=1
        $region255: #{classifier_head.1} parent=253 // loop_pre_header
          _
        $region256: #{classifier_head.1} parent=253 // loop_header
          %s407 = sphi 0, %s411
          %p408 = scmp.ge.s32.totalorder %s407, 1
          %s412 = sphi %s402, %s402
          %s413 = sphi %s404, %s404
        $region257: #{classifier_head.1} parent=253 // loop_header_branch
          %410 = sbr.rel (%p408) target = $region261
        $region258: #{classifier_head.1} parent=253 // loop_body
          %v414 = vld [vmem:[%s412] sm:%s405]
          %415 = vst [vmem:[%s413] sm:%s405] %v414
        $region259: #{classifier_head.1} parent=253 // loop_footer
          %s411 = sadd.s32 1, %s407
        $region260: #{classifier_head.1} parent=253 // loop_footer_branch
          %406 = sbr.rel target = $region256
        $region261: #{classifier_head.1} parent=253 // loop_exit
          _
      $region254: #{classifier_head.1} parent=238 // pred_fallthru
        _
    $region239: #{classifier_head.1} parent=1 // pred_fallthru
      _
    // Predicated region
    $region240: #{classifier_head.1} parent=1 // pred_check
      %p381 = pneg %p377
    $region241: #{classifier_head.1} parent=1 // pred_check_branch
      %383 = sbr.rel (%p381) target = $region243
    $region242: #{classifier_head.1} parent=1 // pred_region
      %s384 = sshllo.u32 0, 1
      loop: start=0, step=1, limit=1
      $region244: #{classifier_head.1} parent=242 // loop_pre_header
        _
      $region245: #{classifier_head.1} parent=242 // loop_header
        %s386 = sphi 0, %s390
        %p387 = scmp.ge.s32.totalorder %s386, 1
        %s391 = sphi %s373, %s373
        %s392 = sphi %s374, %s374
      $region246: #{classifier_head.1} parent=242 // loop_header_branch
        %389 = sbr.rel (%p387) target = $region250
      $region247: #{classifier_head.1} parent=242 // loop_body
        %v393 = vld [vmem:[%s391] sm:%s384]
        %394 = vst [vmem:[%s392] sm:%s384] %v393
      $region248: #{classifier_head.1} parent=242 // loop_footer
        %s390 = sadd.s32 1, %s386
      $region249: #{classifier_head.1} parent=242 // loop_footer_branch
        %385 = sbr.rel target = $region245
      $region250: #{classifier_head.1} parent=242 // loop_exit
        _
    $region243: #{classifier_head.1} parent=1 // pred_fallthru
      _
    // Predicated region
    $region262: #{classifier_head.1} parent=1 // pred_check
      _
    $region263: #{classifier_head.1} parent=1 // pred_check_branch
      %418 = sbr.rel (0) target = $region265
    $region264: #{classifier_head.1} parent=1 // pred_region
      %419 = vsyncadd %s375, 16
    $region265: #{classifier_head.1} parent=1 // pred_fallthru
      _
    %s420 = smul.u32 1, 1
    %s421 = sshll.u32 %s420, 4
    %422 = dma.done [#allocation3], %s421
    %s423 = sshll.u32 %s420, 4
    %424 = dma.done %s93, %s423
    %s425 = sshll.u32 %s420, 4
    %426 = dma.done %s140, %s425
    %s427 = sshll.u32 %s420, 4
    %428 = dma.done %s187, %s427
    %s429 = sshll.u32 %s420, 4
    %430 = dma.done %s234, %s429
    %s431 = sshll.u32 %s420, 4
    %432 = dma.done %s281, %s431
    %s433 = sshll.u32 %s420, 4
    %434 = dma.done %s328, %s433
    %s435 = sshll.u32 %s420, 4
    %436 = dma.done %s375, %s435
    %v437 = vld [vmem:[%s1] sm:$0xff]
    %vm438 = vcmp.ne.s32.totalorder %v437, 1
    %v439 = vsel %vm438, 1, 0
    %v440 = vcvt.s32.f32 %v439
    %v441 = vld [vmem:[#allocation2] sm:$0xff]
    %443 = vset.pattern.permute.xlu0 0
    %444 = vperm.xlu0 %443, %v440
    %v445 = vpop.permute.xlu0 %444
    %v447 = vmul.f32 %v441, %v445
    %v448 = vpack.c.bf16 %v447, %v447
    %v449 = vld [vmem:[%s4] sm:$0xf]
    %v450 = vld [vmem:[%s4 + $0x4] sm:$0xf]
    %v451 = vld [vmem:[%s4 + $0x8] sm:$0xf]
    %v452 = vld [vmem:[%s4 + $0xc] sm:$0xf]
    %v453 = vld [vmem:[%s5] sm:$0x1]
    %v455 = vlaneseq
    %v456 = vshrl.u32 %v455, 7
    %v457 = vsub.s32 0, %v456
    %v458 = vrot.slane %v453, %v457
    %v464 = vunpack.c.l.b16 %v449
    %v465 = vunpack.c.l.b16 %v450
    %v466 = vunpack.c.l.b16 %v451
    %v467 = vunpack.c.l.b16 %v452
    %v468 = vpack.c.b16 %v465, %v464
    %v469 = vpack.c.b16 %v467, %v466
    %vm472 = vcmask 261120
    %v474 = vsel %vm472, %v448, 0
    %476 = vmatprep.subr.bf16.mxu0 0
    %477 = vmatpush1.bf16.msra.mxu0 %v468
    %478 = vmatprep.subr.bf16.mxu0 0
    %479 = vmatpush1.bf16.msra.mxu0 %v469
    %480 = vmatprep.subr.bf16.mxu0 0
    %481 = vmatpush1.bf16.msra.mxu0 0
    %482 = vmatprep.subr.bf16.mxu0 0
    %483 = vmatpush1.bf16.msra.mxu0 0
    %484 = vmatprep.subr.bf16.mxu0 0
    %485 = vmatpush1.bf16.msra.mxu0 0
    %486 = vmatprep.subr.bf16.mxu0 0
    %487 = vmatpush1.bf16.msra.mxu0 0
    %488 = vmatprep.subr.bf16.mxu0 0
    %489 = vmatpush1.bf16.msra.mxu0 0
    %490 = vmatprep.subr.bf16.mxu0 0
    %491 = vmatpush1.bf16.msra.mxu0 0
    %492 = vmatprep.subr.bf16.mxu0 0
    %493 = vmatpush1.bf16.msra.mxu0 0
    %494 = vmatprep.subr.bf16.mxu0 0
    %495 = vmatpush1.bf16.msra.mxu0 0
    %496 = vmatprep.subr.bf16.mxu0 0
    %497 = vmatpush1.bf16.msra.mxu0 0
    %498 = vmatprep.subr.bf16.mxu0 0
    %499 = vmatpush1.bf16.msra.mxu0 0
    %500 = vmatprep.subr.bf16.mxu0 0
    %501 = vmatpush1.bf16.msra.mxu0 0
    %502 = vmatprep.subr.bf16.mxu0 0
    %503 = vmatpush1.bf16.msra.mxu0 0
    %504 = vmatprep.subr.bf16.mxu0 0
    %505 = vmatpush1.bf16.msra.mxu0 0
    %506 = vmatprep.subr.bf16.mxu0 0
    %507 = vmatpush1.bf16.msra.mxu0 0
    %508 = vmatprep.mubr.bf16.mxu0 0
    %509 = vmatmul.mubr.bf16.gmra.mrb[0].mxu0 %v474
    %v510 = vpop.f32.mrb[0].mxu0
    %v511 = vadd.f32 %v458, %v510
    %v512 = vpop.f32.mrb[0].mxu0
    %v513 = vpop.f32.mrb[0].mxu0
    %v514 = vpop.f32.mrb[0].mxu0
    %515 = vdwg.mxu0
    %516 = vmax.xlane.f32.xlu0 %v511
    %v517 = vpop.xlane.xlu0 %516
    %v518 = vsub.f32 %v511, %v517
    %v519 = vmul.f32 %v518, 1.442695
    %v520 = vpow.pop %v519
    %521 = vadd.xlane.f32.xlu0 %v520
    %v522 = vpop.xlane.xlu0 %521
    %v523 = vrcp.pop %v522
    %v524 = vmul.f32 %v520, %v523
    %525 = vst [vmem:[%s6] sm:$0xff] %v524
    %v526 = vlog2.pop %v522
    %v527 = vmul.f32 %v526, 0.6931472
    %v528 = vsub.f32 %v518, %v527
    %v529 = vlaneseq
    %v530 = vand.u32 %v529, 127
    %v531 = vld [vmem:[%s2] sm:$0xff]
    %532 = vset.pattern.permute.xlu0 0
    %533 = vperm.xlu0 %532, %v531
    %v534 = vpop.permute.xlu0 %533
    %vm535 = vcmp.eq.s32.totalorder %v530, %v534
    %v536 = vsel %vm535, 1, 0
    %v537 = vcvt.s32.f32 %v536
    %v538 = vlaneseq
    %v539 = vshrl.u32 %v538, 7
    %vm540 = vcmp.lt.s32.totalorder %v539, 2
    %v541 = vsel %vm540, 1, 0
    %v542 = vcvt.s32.f32 %v541
    %v543 = vmul.f32 %v537, %v528
    %544 = vadd.xlane.f32.xlu0 %v543
    %v545 = vpop.xlane.xlu0 %544
    %v546 = vsub.f32 0.0, %v545
    %v547 = vmul.f32 %v546, %v542
    %vm548 = vcmask 7168
    %v549 = vsel %vm548, %v547, 0.0
    %550 = vadd.xlane.f32.xlu0 %v549
    %v551 = vpop.xlane.xlu0 %550
    %v552 = vrot.slane %v551, 4
    %v553 = vadd.f32 %v551, %v552
    %v554 = vrot.slane %v553, 2
    %v555 = vadd.f32 %v553, %v554
    %v556 = vrot.slane %v555, 1
    %v557 = vadd.f32 %v555, %v556
    %s558 = vtos %v557
    %s559 = smul.f32 %s558, 0.5
    %s560 = scalar_lea.smem [#allocation7], 0
    %561 = sst [smem:[%s560]] %s559
    // Predicated region
    $region266: #{classifier_head.1} parent=1 // pred_check
      _
    $region267: #{classifier_head.1} parent=1 // pred_check_branch
      %563 = sbr.rel (0) target = $region269
    $region268: #{classifier_head.1} parent=1 // pred_region
      _
    $region269: #{classifier_head.1} parent=1 // pred_fallthru
      _
    // Predicated region
    $region270: #{classifier_head.1} parent=1 // pred_check
      _
    $region271: #{classifier_head.1} parent=1 // pred_check_branch
      %565 = sbr.rel (0) target = $region273
    $region272: #{classifier_head.1} parent=1 // pred_region
      %s567 = ssub.s32 16, 16
      %568 = vsyncadd [#allocation5], %s567
      %571 = dma.smem_to_hbm [#allocation7], 16, %s7, [#allocation5]
    $region273: #{classifier_head.1} parent=1 // pred_fallthru
      _
    // Predicated region
    $region274: #{classifier_head.1} parent=1 // pred_check
      _
    $region275: #{classifier_head.1} parent=1 // pred_check_branch
      %573 = sbr.rel (0) target = $region277
    $region276: #{classifier_head.1} parent=1 // pred_region
      _
    $region277: #{classifier_head.1} parent=1 // pred_fallthru
      _
    // Predicated region
    $region278: #{classifier_head.1} parent=1 // pred_check
      _
    $region279: #{classifier_head.1} parent=1 // pred_check_branch
      %575 = sbr.rel (0) target = $region281
    $region280: #{classifier_head.1} parent=1 // pred_region
      %576 = dma.done [#allocation5], 16
    $region281: #{classifier_head.1} parent=1 // pred_fallthru
      _
    %577 = sfence
    %578 = vsyncpa [#allocation5], 1
    %579 = vsyncpa [#allocation6], 1
  %580 = vsyncmov [#allocation3]
  %s581 = vpop.sfrf %580
  %p582 = scmp.eq.s32.totalorder %s581, 0
  %p583 = pneg %p582
  %585 = shalt.err (%p583)
  %s586 = scalar_lea.sflag [#allocation3], 1
  %587 = vsyncmov %s586
  %s588 = vpop.sfrf %587
  %p589 = scmp.eq.s32.totalorder %s588, 0
  %p590 = pneg %p589
  %592 = shalt.err (%p590)
  %s593 = scalar_lea.sflag [#allocation3], 2
  %594 = vsyncmov %s593
  %s595 = vpop.sfrf %594
  %p596 = scmp.eq.s32.totalorder %s595, 0
  %p597 = pneg %p596
  %599 = shalt.err (%p597)
  %s600 = scalar_lea.sflag [#allocation3], 3
  %601 = vsyncmov %s600
  %s602 = vpop.sfrf %601
  %p603 = scmp.eq.s32.totalorder %s602, 0
  %p604 = pneg %p603
  %606 = shalt.err (%p604)
  %s607 = scalar_lea.sflag [#allocation3], 4
  %608 = vsyncmov %s607
  %s609 = vpop.sfrf %608
  %p610 = scmp.eq.s32.totalorder %s609, 0
  %p611 = pneg %p610
  %613 = shalt.err (%p611)
  %s614 = scalar_lea.sflag [#allocation3], 5
  %615 = vsyncmov %s614
  %s616 = vpop.sfrf %615
  %p617 = scmp.eq.s32.totalorder %s616, 0
  %p618 = pneg %p617
  %620 = shalt.err (%p618)
  %s621 = scalar_lea.sflag [#allocation3], 6
  %622 = vsyncmov %s621
  %s623 = vpop.sfrf %622
  %p624 = scmp.eq.s32.totalorder %s623, 0
  %p625 = pneg %p624
  %627 = shalt.err (%p625)
  %s628 = scalar_lea.sflag [#allocation3], 7
  %629 = vsyncmov %s628
  %s630 = vpop.sfrf %629
  %p631 = scmp.eq.s32.totalorder %s630, 0
  %p632 = pneg %p631
  %634 = shalt.err (%p632)

</llo_original>
